<compile_context>
chip_gen: v5e
topology: v5e:2x2
jax: 0.10.0
libtpu: 0.0.40
codegen_flags: <defaults>
</compile_context>

<pallas_src>
import functools

import jax
import jax.numpy as jnp
from jax import lax
from jax.experimental import pallas as pl
from jax.experimental.pallas import tpu as pltpu


_N_DMA_SEMS = 8  # small semaphore ring for the HBM-gather path


def _round_up(n, m):
    return pl.cdiv(n, m) * m


# ---------------------------------------------------------------------------
# Path A: table resident in VMEM, gather = one-hot matmul on the MXU.
# ---------------------------------------------------------------------------
def _vmem_lookup_kernel(idx_ref, emb_ref, o_ref):
    """idx_ref: VMEM (tb, 1) int32; emb_ref: VMEM (vocab, dim); o_ref: VMEM (tb, dim)."""
    tb = o_ref.shape[0]
    vocab = emb_ref.shape[0]
    ids = idx_ref[...]                                            # (tb, 1)
    cols = lax.broadcasted_iota(jnp.int32, (tb, vocab), 1)        # (tb, vocab)
    onehot = (ids == cols).astype(emb_ref.dtype)                  # (tb, vocab)
    gathered = jnp.dot(onehot, emb_ref[...],
                       preferred_element_type=jnp.float32,
                       precision=lax.Precision.HIGHEST)
    o_ref[...] = gathered.astype(o_ref.dtype)


# ---------------------------------------------------------------------------
# Path B: table stays in HBM; per-row DMAs gathered into the output tile.
# ---------------------------------------------------------------------------
def _hbm_gather_kernel(tok_block, idx_ref, emb_hbm, o_ref, sems):
    """idx_ref: SMEM (n_pad,) int32 (scalar prefetch); emb_hbm: HBM (vocab, dim);
    o_ref: VMEM (tok_block, dim); sems: DMA semaphore ring (_N_DMA_SEMS,)."""
    base = pl.multiple_of(pl.program_id(0) * tok_block, tok_block)

    # Issue every row DMA for this block first (all SMEM index reads happen before
    # any .wait(), preserving sst->sld forwarding), then drain: HBM reads overlap.
    def issue(t, carry):
        row = idx_ref[base + t]
        pltpu.make_async_copy(
            emb_hbm.at[pl.ds(row, 1), :],
            o_ref.at[pl.ds(t, 1), :],
            sems.at[t % _N_DMA_SEMS],
        ).start()
        return carry

    lax.fori_loop(0, tok_block, issue, 0, unroll=8)

    def drain(t, carry):
        pltpu.make_async_copy(
            emb_hbm.at[pl.ds(0, 1), :],          # src slice irrelevant for the wait amount
            o_ref.at[pl.ds(t, 1), :],
            sems.at[t % _N_DMA_SEMS],
        ).wait()
        return carry

    lax.fori_loop(0, tok_block, drain, 0, unroll=8)
    # TODO(synk): cross-grid-step prefetch (a (2, tok_block, dim) VMEM scratch) would
    # additionally hide step-i gather latency behind step i-1; not needed for the
    # small-vocab demo which takes the VMEM-resident-table path.


def _fits_vmem_table_path(vocab, dim, tb, itemsize):
    """Conservative: does the VMEM-resident-table path fit the scoped VMEM budget on
    every generation (v5e/v6e scoped default 16/32 MiB, v7x only 64 MiB physical)?"""
    try:
        physical = int(pltpu.get_tpu_info().vmem_capacity_bytes)
    except Exception:
        physical = 64 * 1024 * 1024
    budget = min(physical // 4, 12 * 1024 * 1024)
    need = (2 * vocab * dim * itemsize            # (double-buffered) table input
            + 2 * tb * dim * max(itemsize, 4)     # double-buffered output tile / f32 acc
            + tb * vocab * (itemsize + 4)         # one-hot operand + f32 intermediates
            + 4 * tb)                             # token ids
    return need <= budget


def word_embedding_forward(idx, emb_table, *, tok_block=256, force_hbm_gather=False):
    """y[...] = emb_table[idx[...]]  (row `ntoken` of emb_table is the zero padding row).

    idx       : int array, any shape (e.g. (batch, seq))
    emb_table : (ntoken + 1, dim) float table
    returns   : idx.shape + (dim,)
    """
    assert tok_block % 8 == 0 and tok_block > 0
    vocab, dim = emb_table.shape
    orig_shape = idx.shape
    itemsize = jnp.dtype(emb_table.dtype).itemsize

    # Flatten and clamp ids (jnp.take-style clamping; also keeps every DMA in bounds).
    flat = jnp.clip(idx.reshape(-1).astype(jnp.int32), 0, vocab - 1)
    n_tok = flat.shape[0]

    # Rows per grid step: big blocks amortize the ~0.35 us per-step overhead and keep
    # many row reads in flight, but never bigger than the (padded) token count.
    tb = int(min(tok_block, _round_up(n_tok, 8)))
    n_pad = int(_round_up(n_tok, tb))
    if n_pad != n_tok:
        # Pad with the padding-token id (its table row is zero and it is in bounds).
        flat = jnp.concatenate(
            [flat, jnp.full((n_pad - n_tok,), vocab - 1, jnp.int32)])
    n_blocks = n_pad // tb

    if (not force_hbm_gather) and _fits_vmem_table_path(vocab, dim, tb, itemsize):
        # ---- Path A: table lives in VMEM, gather = one-hot matmul on the MXU. ----
        cost = pl.CostEstimate(
            flops=2 * n_pad * vocab * dim, transcendentals=0,
            bytes_accessed=vocab * dim * itemsize + n_pad * 4 + n_pad * dim * itemsize)
        out = pl.pallas_call(
            _vmem_lookup_kernel,
            out_shape=jax.ShapeDtypeStruct((n_pad, dim), emb_table.dtype),
            grid_spec=pltpu.PrefetchScalarGridSpec(
                num_scalar_prefetch=0,
                grid=(n_blocks,),
                in_specs=[
                    pl.BlockSpec((tb, 1), lambda i: (i, 0)),        # token ids
                    pl.BlockSpec((vocab, dim), lambda i: (0, 0)),   # whole table, VMEM-resident
                ],
                out_specs=pl.BlockSpec((tb, dim), lambda i: (i, 0)),
            ),
            compiler_params=pltpu.CompilerParams(
                dimension_semantics=("parallel",)),
            cost_estimate=cost,
        )(flat.reshape(n_pad, 1), emb_table)
    else:
        # ---- Path B: table stays in HBM; gather rows with overlapped DMAs. ----
        cost = pl.CostEstimate(
            flops=0, transcendentals=0,
            bytes_accessed=2 * n_pad * dim * itemsize + n_pad * 4)
        out = pl.pallas_call(
            functools.partial(_hbm_gather_kernel, tb),
            out_shape=jax.ShapeDtypeStruct((n_pad, dim), emb_table.dtype),
            grid_spec=pltpu.PrefetchScalarGridSpec(
                num_scalar_prefetch=1,                              # token ids -> SMEM
                grid=(n_blocks,),
                in_specs=[pl.BlockSpec(memory_space=pl.ANY)],       # table stays in HBM
                out_specs=pl.BlockSpec((tb, dim), lambda i, ids: (i, 0)),
                scratch_shapes=[pltpu.SemaphoreType.DMA((_N_DMA_SEMS,))],
            ),
            compiler_params=pltpu.CompilerParams(
                dimension_semantics=("parallel",)),
            cost_estimate=cost,
        )(flat, emb_table)

    # TODO(synk): nn.Dropout with p > 0 in training mode would need
    # pltpu.prng_seed / prng_random_bits masking; module default p=0.0 (and eval
    # mode) is the identity, so nothing to do here.
    return out[:n_tok].reshape(*orig_shape, dim)


def init_word_embedding(key, ntoken, dim):
    """Table init matching nn.Embedding(ntoken+1, dim, padding_idx=ntoken)."""
    table = jax.random.normal(key, (ntoken + 1, dim), jnp.float32)
    table = table.at[ntoken].set(0.0)                    # padding row = 0
    return table


def word_embedding_ref(idx, emb_table):
    """Pure-JAX reference for correctness checking."""
    return jnp.take(emb_table, idx, axis=0)


if __name__ == "__main__":
    ntoken, dim = 32, 128          # WordEmbedding(ntoken=32, dim=128)
    batch, seq = 2, 8

    key = jax.random.PRNGKey(0)
    key, kt, kx = jax.random.split(key, 3)

    table = init_word_embedding(kt, ntoken, dim)
    idx = jax.random.randint(kx, (batch, seq), 0, ntoken)
    idx = idx.at[0, -1].set(ntoken)                      # exercise padding token

    ref = word_embedding_ref(idx, table)

    # Fast path: table resident in VMEM, one-hot gather on the MXU.
    out_vmem = jax.block_until_ready(word_embedding_forward(idx, table))
    assert out_vmem.shape == (batch, seq, dim)
    assert jnp.allclose(out_vmem, ref, rtol=1e-6, atol=1e-6)
    assert jnp.all(out_vmem[0, -1] == 0.0)               # padding row is zero

    # Large-vocab path: HBM-resident table + overlapped per-row DMAs (forced here
    # so both paths are exercised and verified).
    out_hbm = jax.block_until_ready(
        word_embedding_forward(idx, table, tok_block=128, force_hbm_gather=True))
    assert out_hbm.shape == (batch, seq, dim)
    assert jnp.array_equal(out_hbm, ref)
    assert jnp.all(out_hbm[0, -1] == 0.0)

    print("KERNEL_OK")
</pallas_src>

<mosaic_0001>
module attributes {stable_mosaic.version = 11 : i64} {
  func.func @_vmem_lookup_kernel(%arg0: i32, %arg1: memref<16x1xi32, #tpu.memory_space<vmem>>, %arg2: memref<33x128xf32, #tpu.memory_space<vmem>>, %arg3: memref<16x128xf32, #tpu.memory_space<vmem>>) attributes {dimension_semantics = [#tpu.dimension_semantics<parallel>], iteration_bounds = array<i64: 1>, scalar_prefetch = 0 : i64, scratch_operands = 0 : i64, tpu.core_type = #tpu.core_type<tc>, window_params = [{transform_indices = @transform_0, window_bounds = array<i64: 16, 1>}, {pipeline_mode = #tpu.pipeline_mode<synchronous>, transform_indices = @transform_1, window_bounds = array<i64: 33, 128>}, {transform_indices = @transform_2, window_bounds = array<i64: 16, 128>}]} {
    %c0 = arith.constant 0 : index
    %c0_0 = arith.constant 0 : index
    %0 = vector.load %arg1[%c0, %c0_0] : memref<16x1xi32, #tpu.memory_space<vmem>>, vector<16x1xi32>
    %1 = tpu.iota {dimensions = array<i32: 1>} : vector<16x33xi32>
    %2 = vector.broadcast %0 : vector<16x1xi32> to vector<16x33xi32>
    %3 = arith.cmpi eq, %2, %1 : vector<16x33xi32>
    %4 = arith.extui %3 : vector<16x33xi1> to vector<16x33xi32>
    %5 = arith.sitofp %4 : vector<16x33xi32> to vector<16x33xf32>
    %c0_1 = arith.constant 0 : index
    %c0_2 = arith.constant 0 : index
    %6 = vector.load %arg2[%c0_1, %c0_2] : memref<33x128xf32, #tpu.memory_space<vmem>>, vector<33x128xf32>
    %cst = arith.constant dense<0.000000e+00> : vector<16x128xf32>
    %7 = tpu.matmul %5, %6, %cst {dimension_numbers = #tpu.dot_dimension_numbers<[1], [0], [0], [1], [0, 0, 1, 1], [], []>, precision = #tpu.contract_precision<fp32>} : vector<16x33xf32>, vector<33x128xf32>, vector<16x128xf32> -> vector<16x128xf32>
    %c0_3 = arith.constant 0 : index
    %c0_4 = arith.constant 0 : index
    %8 = vector.load %arg3[%c0_3, %c0_4] : memref<16x128xf32, #tpu.memory_space<vmem>>, vector<16x128xf32>
    tpu.vector_store %arg3[%c0_3, %c0_4], %7 {strides = array<i32>} : memref<16x128xf32, #tpu.memory_space<vmem>>, vector<16x128xf32>,
    return
  }
  func.func @transform_0(%arg0: i32) -> (i32, i32) {
    %c0_i32 = arith.constant 0 : i32
    %c0_i32_0 = arith.constant 0 : i32
    return %arg0, %c0_i32 : i32, i32
  }
  func.func @transform_1(%arg0: i32) -> (i32, i32) {
    %c0_i32 = arith.constant 0 : i32
    %c0_i32_0 = arith.constant 0 : i32
    %c0_i32_1 = arith.constant 0 : i32
    return %c0_i32, %c0_i32_0 : i32, i32
  }
  func.func @transform_2(%arg0: i32) -> (i32, i32) {
    %c0_i32 = arith.constant 0 : i32
    %c0_i32_0 = arith.constant 0 : i32
    return %arg0, %c0_i32 : i32, i32
  }
}

</mosaic_0001>

<llo_original>
// kernel: tpu_custom_call.1
$region0: #{tpu_custom_call.1}
  #allocation0 [shape = 'u32[]', space=smem, size = 0x4, offset = 0x4, fixed_abs, tag = 'smem constant byte address 0x4 - core index']
  #allocation1 [shape = 'u32[72,128]{1,0:T(1,128)}', space=vmem, size = 0x9000, scoped, tag = 'internal scratch']
  %s0 = inlined_call_operand.vmem [shape: s32[16,1], index: 0, kind: input, shape index: {}]
  %s1 = inlined_call_operand.hbm [shape: f32[33,128], index: 1, kind: input, shape index: {}]
  %s2 = inlined_call_operand.hbm [shape: f32[16,128], index: 2, kind: output, shape index: {}]
  %s3 = sld [smem:[#allocation0]]
  $region22: #{tpu_custom_call.1} parent=0
    _
  %s5 = ssub.s32 1, %s3
  %s6 = scalar_select 0, %s5, %s3
  $region1: #{tpu_custom_call.1} parent=0
    #allocation2 [shape = 'u8[20480]{0}', space=vmem, size = 0x5000, scoped, tag = 'input window, operand 1, single buffered']
    #allocation3 [shape = 's32[1]{0}', space=sflag, size = 0x4, scoped, tag = 'scoped memory for tpu_custom_call.1']
    #allocation4 [shape = 's32[1]{0}', space=sflag, size = 0x4, scoped, tag = 'scoped memory for tpu_custom_call.1']
    #allocation5 [shape = 'u8[8192]{0}', space=vmem, size = 0x2000, scoped, tag = 'output window, operand 0, single buffered']
    %7 = vsyncpa [#allocation3], 0
    %8 = vsyncpa [#allocation4], 0
    // Predicated region
    $region2: #{tpu_custom_call.1} parent=1 // pred_check
      _
    $region3: #{tpu_custom_call.1} parent=1 // pred_check_branch
      %10 = sbr.rel (0) target = $region5
    $region4: #{tpu_custom_call.1} parent=1 // pred_region
      _
    $region5: #{tpu_custom_call.1} parent=1 // pred_fallthru
      _
    // Predicated region
    $region6: #{tpu_custom_call.1} parent=1 // pred_check
      _
    $region7: #{tpu_custom_call.1} parent=1 // pred_check_branch
      %12 = sbr.rel (0) target = $region9
    $region8: #{tpu_custom_call.1} parent=1 // pred_region
      %14 = vsyncadd [#allocation3], 0
      %s15 = sshll.u32 %s1, 4
      %s16 = int_to_ptr.hbm [resolvable:$true] %s15
      %s17 = sshll.u32 [#allocation2], 4
      %s18 = int_to_ptr.vmem [resolvable:$true] %s17
      %23 = dma.hbm_to_vmem [thread:$0]  %s16, 640, %s18, [#allocation3], 128, 128, 8
    $region9: #{tpu_custom_call.1} parent=1 // pred_fallthru
      _
    // Predicated region
    $region10: #{tpu_custom_call.1} parent=1 // pred_check
      _
    $region11: #{tpu_custom_call.1} parent=1 // pred_check_branch
      %25 = sbr.rel (0) target = $region13
    $region12: #{tpu_custom_call.1} parent=1 // pred_region
      %27 = dma.done [#allocation3], 640
    $region13: #{tpu_custom_call.1} parent=1 // pred_fallthru
      _
    %v28 = vld [vmem:[%s0] sm:$0xff]
    %v29 = vld [vmem:[%s0 + $0x8] sm:$0xff]
    %v30 = vlaneseq
    %v31 = vand.u32 %v30, 127
    %32 = vset.pattern.permute.xlu0 0
    %33 = vperm.xlu0 %32, %v28
    %v34 = vpop.permute.xlu0 %33
    %35 = vset.pattern.permute.xlu0 0
    %36 = vperm.xlu0 %35, %v29
    %v37 = vpop.permute.xlu0 %36
    %vm38 = vcmp.eq.s32.totalorder %v34, %v31
    %vm39 = vcmp.eq.s32.totalorder %v37, %v31
    %v40 = vsel %vm38, 1, 0
    %v41 = vsel %vm39, 1, 0
    %v42 = vcvt.s32.f32 %v40
    %v43 = vcvt.s32.f32 %v41
    %v44 = vld [vmem:[#allocation2] sm:$0xff]
    %v45 = vld [vmem:[#allocation2 + $0x8] sm:$0xff]
    %v46 = vld [vmem:[#allocation2 + $0x10] sm:$0xff]
    %v47 = vld [vmem:[#allocation2 + $0x18] sm:$0xff]
    %v48 = vld [vmem:[#allocation2 + $0x20] sm:$0x1]
    %vm49 = vcmask 269312
    %v51 = vsel %vm49, %v42, 0
    %v54 = vsel %vm49, %v43, 0
    %vm56 = vcmask 1040384
    %v58 = vsel %vm56, %v48, 0
    %60 = vmatpush.msra.mxu0 0.0
    %61 = vmatpush.msra.mxu0 0.0
    %62 = vmatpush.msra.mxu0 0.0
    %63 = vmatpush.msra.mxu0 0.0
    %64 = vmatpush.msra.mxu0 0.0
    %65 = vmatpush.msra.mxu0 0.0
    %66 = vmatpush.msra.mxu0 0.0
    %67 = vmatpush.msra.mxu0 0.0
    %68 = vmatpush.msra.mxu0 0.0
    %69 = vmatpush.msra.mxu0 0.0
    %70 = vmatpush.msra.mxu0 0.0
    %v71 = vand.u32 %v58, 4294901760
    %72 = vmatpush.msra.mxu0 %v71
    %v73 = vand.u32 %v47, 4294901760
    %74 = vmatpush.msra.mxu0 %v73
    %v75 = vand.u32 %v46, 4294901760
    %76 = vmatpush.msra.mxu0 %v75
    %v77 = vand.u32 %v45, 4294901760
    %78 = vmatpush.msra.mxu0 %v77
    %v79 = vand.u32 %v44, 4294901760
    %80 = vmatpush.msra.mxu0 %v79
    %v81 = vand.u32 %v51, 4294901760
    %v82 = vsub.f32 %v51, %v81
    %v83 = vand.u32 %v82, 4294901760
    %v84 = vsub.f32 %v82, %v83
    %v85 = vand.u32 %v84, 4294901760
    %86 = vmatmul.f32.gmra.mxu0 %v85
    %v87 = vpop.f32.mrf.mxu0
    %v88 = vadd.f32 0.0, %v87
    %v89 = vand.u32 %v54, 4294901760
    %v90 = vsub.f32 %v54, %v89
    %v91 = vand.u32 %v90, 4294901760
    %v92 = vsub.f32 %v90, %v91
    %v93 = vand.u32 %v92, 4294901760
    %94 = vmatmul.f32.gmra.mxu0 %v93
    %v95 = vpop.f32.mrf.mxu0
    %v96 = vadd.f32 0.0, %v95
    %97 = vdwg.mxu0
    %98 = vmatpush.msra.mxu0 0.0
    %99 = vmatpush.msra.mxu0 0.0
    %100 = vmatpush.msra.mxu0 0.0
    %101 = vmatpush.msra.mxu0 0.0
    %102 = vmatpush.msra.mxu0 0.0
    %103 = vmatpush.msra.mxu0 0.0
    %104 = vmatpush.msra.mxu0 0.0
    %105 = vmatpush.msra.mxu0 0.0
    %106 = vmatpush.msra.mxu0 0.0
    %107 = vmatpush.msra.mxu0 0.0
    %108 = vmatpush.msra.mxu0 0.0
    %v109 = vand.u32 %v58, 4294901760
    %v110 = vsub.f32 %v58, %v109
    %v111 = vand.u32 %v110, 4294901760
    %v112 = vsub.f32 %v110, %v111
    %v113 = vand.u32 %v112, 4294901760
    %114 = vmatpush.msra.mxu0 %v113
    %v115 = vand.u32 %v47, 4294901760
    %v116 = vsub.f32 %v47, %v115
    %v117 = vand.u32 %v116, 4294901760
    %v118 = vsub.f32 %v116, %v117
    %v119 = vand.u32 %v118, 4294901760
    %120 = vmatpush.msra.mxu0 %v119
    %v121 = vand.u32 %v46, 4294901760
    %v122 = vsub.f32 %v46, %v121
    %v123 = vand.u32 %v122, 4294901760
    %v124 = vsub.f32 %v122, %v123
    %v125 = vand.u32 %v124, 4294901760
    %126 = vmatpush.msra.mxu0 %v125
    %v127 = vand.u32 %v45, 4294901760
    %v128 = vsub.f32 %v45, %v127
    %v129 = vand.u32 %v128, 4294901760
    %v130 = vsub.f32 %v128, %v129
    %v131 = vand.u32 %v130, 4294901760
    %132 = vmatpush.msra.mxu0 %v131
    %v133 = vand.u32 %v44, 4294901760
    %v134 = vsub.f32 %v44, %v133
    %v135 = vand.u32 %v134, 4294901760
    %v136 = vsub.f32 %v134, %v135
    %v137 = vand.u32 %v136, 4294901760
    %138 = vmatpush.msra.mxu0 %v137
    %v139 = vand.u32 %v51, 4294901760
    %140 = vmatmul.f32.gmra.mxu0 %v139
    %v141 = vpop.f32.mrf.mxu0
    %v142 = vadd.f32 %v88, %v141
    %v143 = vand.u32 %v54, 4294901760
    %144 = vmatmul.f32.gmra.mxu0 %v143
    %v145 = vpop.f32.mrf.mxu0
    %v146 = vadd.f32 %v96, %v145
    %147 = vdwg.mxu0
    %148 = vmatpush.msra.mxu0 0.0
    %149 = vmatpush.msra.mxu0 0.0
    %150 = vmatpush.msra.mxu0 0.0
    %151 = vmatpush.msra.mxu0 0.0
    %152 = vmatpush.msra.mxu0 0.0
    %153 = vmatpush.msra.mxu0 0.0
    %154 = vmatpush.msra.mxu0 0.0
    %155 = vmatpush.msra.mxu0 0.0
    %156 = vmatpush.msra.mxu0 0.0
    %157 = vmatpush.msra.mxu0 0.0
    %158 = vmatpush.msra.mxu0 0.0
    %v159 = vand.u32 %v58, 4294901760
    %v160 = vsub.f32 %v58, %v159
    %161 = vmatpush.msra.mxu0 %v160
    %v162 = vand.u32 %v47, 4294901760
    %v163 = vsub.f32 %v47, %v162
    %164 = vmatpush.msra.mxu0 %v163
    %v165 = vand.u32 %v46, 4294901760
    %v166 = vsub.f32 %v46, %v165
    %167 = vmatpush.msra.mxu0 %v166
    %v168 = vand.u32 %v45, 4294901760
    %v169 = vsub.f32 %v45, %v168
    %170 = vmatpush.msra.mxu0 %v169
    %v171 = vand.u32 %v44, 4294901760
    %v172 = vsub.f32 %v44, %v171
    %173 = vmatpush.msra.mxu0 %v172
    %v174 = vand.u32 %v51, 4294901760
    %v175 = vsub.f32 %v51, %v174
    %176 = vmatmul.f32.gmra.mxu0 %v175
    %v177 = vpop.f32.mrf.mxu0
    %v178 = vadd.f32 %v142, %v177
    %v179 = vand.u32 %v54, 4294901760
    %v180 = vsub.f32 %v54, %v179
    %181 = vmatmul.f32.gmra.mxu0 %v180
    %v182 = vpop.f32.mrf.mxu0
    %v183 = vadd.f32 %v146, %v182
    %184 = vdwg.mxu0
    %185 = vmatpush.msra.mxu0 0.0
    %186 = vmatpush.msra.mxu0 0.0
    %187 = vmatpush.msra.mxu0 0.0
    %188 = vmatpush.msra.mxu0 0.0
    %189 = vmatpush.msra.mxu0 0.0
    %190 = vmatpush.msra.mxu0 0.0
    %191 = vmatpush.msra.mxu0 0.0
    %192 = vmatpush.msra.mxu0 0.0
    %193 = vmatpush.msra.mxu0 0.0
    %194 = vmatpush.msra.mxu0 0.0
    %195 = vmatpush.msra.mxu0 0.0
    %v196 = vand.u32 %v58, 4294901760
    %197 = vmatpush.msra.mxu0 %v196
    %v198 = vand.u32 %v47, 4294901760
    %199 = vmatpush.msra.mxu0 %v198
    %v200 = vand.u32 %v46, 4294901760
    %201 = vmatpush.msra.mxu0 %v200
    %v202 = vand.u32 %v45, 4294901760
    %203 = vmatpush.msra.mxu0 %v202
    %v204 = vand.u32 %v44, 4294901760
    %205 = vmatpush.msra.mxu0 %v204
    %v206 = vand.u32 %v51, 4294901760
    %v207 = vsub.f32 %v51, %v206
    %v208 = vand.u32 %v207, 4294901760
    %209 = vmatmul.f32.gmra.mxu0 %v208
    %v210 = vpop.f32.mrf.mxu0
    %v211 = vadd.f32 %v178, %v210
    %v212 = vand.u32 %v54, 4294901760
    %v213 = vsub.f32 %v54, %v212
    %v214 = vand.u32 %v213, 4294901760
    %215 = vmatmul.f32.gmra.mxu0 %v214
    %v216 = vpop.f32.mrf.mxu0
    %v217 = vadd.f32 %v183, %v216
    %218 = vdwg.mxu0
    %219 = vmatpush.msra.mxu0 0.0
    %220 = vmatpush.msra.mxu0 0.0
    %221 = vmatpush.msra.mxu0 0.0
    %222 = vmatpush.msra.mxu0 0.0
    %223 = vmatpush.msra.mxu0 0.0
    %224 = vmatpush.msra.mxu0 0.0
    %225 = vmatpush.msra.mxu0 0.0
    %226 = vmatpush.msra.mxu0 0.0
    %227 = vmatpush.msra.mxu0 0.0
    %228 = vmatpush.msra.mxu0 0.0
    %229 = vmatpush.msra.mxu0 0.0
    %v230 = vand.u32 %v58, 4294901760
    %v231 = vsub.f32 %v58, %v230
    %v232 = vand.u32 %v231, 4294901760
    %233 = vmatpush.msra.mxu0 %v232
    %v234 = vand.u32 %v47, 4294901760
    %v235 = vsub.f32 %v47, %v234
    %v236 = vand.u32 %v235, 4294901760
    %237 = vmatpush.msra.mxu0 %v236
    %v238 = vand.u32 %v46, 4294901760
    %v239 = vsub.f32 %v46, %v238
    %v240 = vand.u32 %v239, 4294901760
    %241 = vmatpush.msra.mxu0 %v240
    %v242 = vand.u32 %v45, 4294901760
    %v243 = vsub.f32 %v45, %v242
    %v244 = vand.u32 %v243, 4294901760
    %245 = vmatpush.msra.mxu0 %v244
    %v246 = vand.u32 %v44, 4294901760
    %v247 = vsub.f32 %v44, %v246
    %v248 = vand.u32 %v247, 4294901760
    %249 = vmatpush.msra.mxu0 %v248
    %v250 = vand.u32 %v51, 4294901760
    %251 = vmatmul.f32.gmra.mxu0 %v250
    %v252 = vpop.f32.mrf.mxu0
    %v253 = vadd.f32 %v211, %v252
    %v254 = vand.u32 %v54, 4294901760
    %255 = vmatmul.f32.gmra.mxu0 %v254
    %v256 = vpop.f32.mrf.mxu0
    %v257 = vadd.f32 %v217, %v256
    %258 = vdwg.mxu0
    %259 = vmatpush.msra.mxu0 0.0
    %260 = vmatpush.msra.mxu0 0.0
    %261 = vmatpush.msra.mxu0 0.0
    %262 = vmatpush.msra.mxu0 0.0
    %263 = vmatpush.msra.mxu0 0.0
    %264 = vmatpush.msra.mxu0 0.0
    %265 = vmatpush.msra.mxu0 0.0
    %266 = vmatpush.msra.mxu0 0.0
    %267 = vmatpush.msra.mxu0 0.0
    %268 = vmatpush.msra.mxu0 0.0
    %269 = vmatpush.msra.mxu0 0.0
    %v270 = vand.u32 %v58, 4294901760
    %271 = vmatpush.msra.mxu0 %v270
    %v272 = vand.u32 %v47, 4294901760
    %273 = vmatpush.msra.mxu0 %v272
    %v274 = vand.u32 %v46, 4294901760
    %275 = vmatpush.msra.mxu0 %v274
    %v276 = vand.u32 %v45, 4294901760
    %277 = vmatpush.msra.mxu0 %v276
    %v278 = vand.u32 %v44, 4294901760
    %279 = vmatpush.msra.mxu0 %v278
    %v280 = vand.u32 %v51, 4294901760
    %281 = vmatmul.f32.gmra.mxu0 %v280
    %v282 = vpop.f32.mrf.mxu0
    %v283 = vadd.f32 %v253, %v282
    %v284 = vand.u32 %v54, 4294901760
    %285 = vmatmul.f32.gmra.mxu0 %v284
    %v286 = vpop.f32.mrf.mxu0
    %v287 = vadd.f32 %v257, %v286
    %288 = vdwg.mxu0
    %289 = vst [vmem:[#allocation5] sm:$0xff] %v283
    %290 = vst [vmem:[#allocation5 + $0x8] sm:$0xff] %v287
    // Predicated region
    $region14: #{tpu_custom_call.1} parent=1 // pred_check
      _
    $region15: #{tpu_custom_call.1} parent=1 // pred_check_branch
      %292 = sbr.rel (0) target = $region17
    $region16: #{tpu_custom_call.1} parent=1 // pred_region
      %294 = vsyncadd [#allocation4], 0
      %s295 = sshll.u32 [#allocation5], 4
      %s296 = int_to_ptr.vmem [resolvable:$true] %s295
      %s297 = sshll.u32 %s2, 4
      %s298 = int_to_ptr.hbm [resolvable:$true] %s297
      %303 = dma.vmem_to_hbm [thread:$0]  %s296, 256, %s298, [#allocation4], 128, 128, 8
    $region17: #{tpu_custom_call.1} parent=1 // pred_fallthru
      _
    // Predicated region
    $region18: #{tpu_custom_call.1} parent=1 // pred_check
      _
    $region19: #{tpu_custom_call.1} parent=1 // pred_check_branch
      %305 = sbr.rel (0) target = $region21
    $region20: #{tpu_custom_call.1} parent=1 // pred_region
      %307 = dma.done [#allocation4], 256
    $region21: #{tpu_custom_call.1} parent=1 // pred_fallthru
      _
    %308 = vsyncpa [#allocation3], 1
    %309 = vsyncpa [#allocation4], 1

</llo_original>
